<compile_context>
chip_gen: v5e
topology: v5e:2x2
jax: 0.10.0
libtpu: 0.0.40
codegen_flags: <defaults>
</compile_context>

<pallas_src>
import functools

import jax
import jax.numpy as jnp
from jax import lax
from jax.experimental import pallas as pl
from jax.experimental.pallas import tpu as pltpu


def _fashion_trend_loss_kernel(pred_t_ref, tgt_ref, style_ref, mf_ref, temp_ref,
                               out_ref, trend_acc, cos_acc, *,
                               total_rows, style_weight, temporal_weight,
                               trend_weight):
    pid = pl.program_id(0)
    blk_b = pred_t_ref.shape[1]

    @pl.when(pid == 0)
    def _init():
        trend_acc[...] = jnp.zeros_like(trend_acc)
        cos_acc[...] = jnp.zeros_like(cos_acc)

    # ---- trend term: per-row cross-entropy, lane-dense layout ---------------
    # logits are (C, blk_b): classes on sublanes, batch rows on lanes.
    logits = pred_t_ref[...].astype(jnp.float32)                    # (C, blk_b)
    C = logits.shape[0]
    col_max = jnp.max(logits, axis=0, keepdims=True)                # (1, blk_b)
    lse = col_max + jnp.log(
        jnp.sum(jnp.exp(logits - col_max), axis=0, keepdims=True))  # (1, blk_b)
    cls_idx = lax.broadcasted_iota(jnp.int32, (C, blk_b), 0)
    # Fused gather of the target logit: no materialized f32 one-hot.
    picked = jnp.sum(jnp.where(cls_idx == tgt_ref[...], logits, 0.0),
                     axis=0, keepdims=True)                         # (1, blk_b)
    lane_idx = lax.broadcasted_iota(jnp.int32, (1, blk_b), 1)
    col_valid = (pid * blk_b + lane_idx) < total_rows               # ragged tail mask
    trend_acc[...] += jnp.sum(jnp.where(col_valid, lse - picked, 0.0),
                              keepdims=True)

    # ---- style term: cosine(style_row, precomputed batch mean) --------------
    sf = style_ref[...].astype(jnp.float32)                         # (blk_b, D)
    mf = mf_ref[...]                                                # (1, D) f32
    dot = jnp.sum(sf * mf, axis=-1, keepdims=True)                  # (blk_b, 1)
    nx2 = jnp.sum(sf * sf, axis=-1, keepdims=True)                  # (blk_b, 1)
    nm2 = jnp.sum(mf * mf, axis=-1, keepdims=True)                  # (1, 1)
    # 1/max(||x||*||m||, 1e-8) == rsqrt(max(||x||^2*||m||^2, 1e-16)) -> EUP slot.
    # NOTE: nx2*nm2 can overflow to inf for extreme feature scales (the pure-JAX
    # reference overflows slightly later); acceptable for realistic features.
    cos = dot * lax.rsqrt(jnp.maximum(nx2 * nm2, 1e-16))            # (blk_b, 1)
    row_idx = lax.broadcasted_iota(jnp.int32, (sf.shape[0], 1), 0)
    row_valid = (pid * blk_b + row_idx) < total_rows
    cos_acc[...] += jnp.sum(jnp.where(row_valid, cos, 0.0), keepdims=True)

    # ---- finalize: temporal MSE + single weighted combine --------------------
    @pl.when(pid == pl.num_programs(0) - 1)
    def _finalize():
        tf = temp_ref[...].astype(jnp.float32)                      # (T, D)
        T, D = tf.shape
        # jnp.roll semantics: rolled[i] = tf[(i-1) % T], so row 0 holds the
        # wrap-around pair; mask it with a single where (no cancellation path,
        # no 1-row slices).
        rolled = pltpu.roll(tf, shift=1, axis=0)
        diff = rolled - tf
        row0 = lax.broadcasted_iota(jnp.int32, (T, D), 0)
        temp_sq = jnp.sum(jnp.where(row0 == 0, 0.0, diff * diff))
        denom = (T - 1) * D
        # T == 1 degenerates to NaN, matching the PyTorch module.
        inv_td = (1.0 / denom) if denom > 0 else float("nan")

        trend_sum = trend_acc[0, 0]
        cos_sum = cos_acc[0, 0]
        # Single weighted divide/combine (constants folded at trace time).
        out_ref[0, 0] = ((trend_weight / total_rows) * trend_sum
                         + style_weight
                         - (style_weight / total_rows) * cos_sum
                         + (temporal_weight * inv_td) * temp_sq)


def fashion_trend_loss(predictions, targets, style_features, temporal_features,
                       style_weight=0.4, temporal_weight=0.3, trend_weight=0.3,
                       block_b=1024):
    """Pallas implementation of FashionTrendLoss.forward. Returns a scalar f32."""
    B, C = predictions.shape
    Bs, D = style_features.shape
    T, Dt = temporal_features.shape
    assert Bs == B, "predictions and style_features must share the batch dim"

    # ---- wrapper layout plumbing (no compute hoisted out of the kernel) ------
    # Lane-dense CE operands (classes on sublanes, batch on lanes) -- the big
    # lever when C << 128.  TODO(synk): if C >= 128, keep the (B, C) layout
    # instead to avoid the extra transpose copy of a large logits array.
    pred_t = predictions.T                                   # (C, B)
    tgt_row = targets.reshape(1, -1).astype(jnp.int32)       # (1, B)
    # Batch-mean style feature precomputed so the gridded kernel is one-pass.
    mf = jnp.mean(style_features.astype(jnp.float32), axis=0, keepdims=True)

    # Batch tile.  At D=128, C<=128, f32 a 1024-row tile is < 1.5 MiB per
    # buffer (x2 double-buffering per input): fits v5e's 16 MiB scoped-VMEM
    # default and is far under v7x's 64 MiB physical VMEM.
    blk = B if B <= block_b else block_b
    if blk != B:
        assert blk % 128 == 0 and blk % 8 == 0, "batch tile must be (8,128)-aligned"
    grid = (pl.cdiv(B, blk),)

    kernel = functools.partial(
        _fashion_trend_loss_kernel,
        total_rows=B,
        style_weight=float(style_weight),
        temporal_weight=float(temporal_weight),
        trend_weight=float(trend_weight),
    )

    grid_spec = pltpu.PrefetchScalarGridSpec(
        num_scalar_prefetch=0,
        grid=grid,
        in_specs=[
            pl.BlockSpec((C, blk), lambda i: (0, i)),        # logits^T  (C, blk)
            pl.BlockSpec((1, blk), lambda i: (0, i)),        # targets   (1, blk)
            pl.BlockSpec((blk, D), lambda i: (i, 0)),        # style     (blk, D)
            pl.BlockSpec(memory_space=pltpu.MemorySpace.VMEM),   # mean style (1, D)
            pl.BlockSpec(memory_space=pltpu.MemorySpace.VMEM),   # temporal  (T, Dt)
        ],
        out_specs=pl.BlockSpec(memory_space=pltpu.MemorySpace.SMEM),  # scalar (1,1)
        scratch_shapes=[pltpu.VMEM((1, 1), jnp.float32),     # sum of per-row CE
                        pltpu.VMEM((1, 1), jnp.float32)],    # sum of cosines
    )

    nbytes = (predictions.size * predictions.dtype.itemsize
              + tgt_row.size * 4
              + style_features.size * style_features.dtype.itemsize
              + mf.size * 4
              + temporal_features.size * temporal_features.dtype.itemsize
              + 4)
    cost = pl.CostEstimate(
        flops=6 * B * C + 8 * B * D + 3 * T * Dt + 4 * B,
        transcendentals=B * C + B,            # exp/log + rsqrt
        bytes_accessed=nbytes,
    )

    out = pl.pallas_call(
        kernel,
        out_shape=jax.ShapeDtypeStruct((1, 1), jnp.float32),
        grid_spec=grid_spec,
        compiler_params=pltpu.CompilerParams(
            # The single grid axis carries the scalar accumulators, hence
            # "arbitrary".  TODO(synk): add a leading size-2 "parallel" axis
            # with per-core partial outputs to use both v7x TensorCores.
            dimension_semantics=("arbitrary",),
            vmem_limit_bytes=32 * 1024 * 1024,
        ),
        cost_estimate=cost,
    )(pred_t, tgt_row, style_features, mf, temporal_features)
    return out[0, 0]


def _reference_loss(predictions, targets, style_features, temporal_features,
                    style_weight=0.4, temporal_weight=0.3, trend_weight=0.3):
    """Pure-JAX reference matching the PyTorch semantics."""
    logp = jax.nn.log_softmax(predictions.astype(jnp.float32), axis=-1)
    trend_loss = -jnp.mean(logp[jnp.arange(predictions.shape[0]), targets])

    sf = style_features.astype(jnp.float32)
    mf = jnp.mean(sf, axis=0, keepdims=True)
    dot = jnp.sum(sf * mf, axis=-1)
    nx = jnp.linalg.norm(sf, axis=-1)
    nm = jnp.linalg.norm(mf, axis=-1)
    cos = dot / jnp.maximum(nx * nm, 1e-8)
    style_loss = 1.0 - jnp.mean(cos)

    tf = temporal_features.astype(jnp.float32)
    diff = tf[1:] - tf[:-1]
    temporal_loss = jnp.mean(diff * diff)

    return (trend_weight * trend_loss + style_weight * style_loss
            + temporal_weight * temporal_loss)


if __name__ == "__main__":
    keys = jax.random.split(jax.random.PRNGKey(0), 8)

    # Case 1: small shapes, single-block grid.
    B, C, D, T = 8, 16, 128, 8
    predictions = jax.random.normal(keys[0], (B, C), dtype=jnp.float32)
    targets = jax.random.randint(keys[1], (B,), 0, C, dtype=jnp.int32)
    style_features = jax.random.normal(keys[2], (B, D), dtype=jnp.float32)
    temporal_features = jax.random.normal(keys[3], (T, D), dtype=jnp.float32)

    loss = jax.block_until_ready(
        fashion_trend_loss(predictions, targets, style_features,
                           temporal_features))
    ref = _reference_loss(predictions, targets, style_features,
                          temporal_features)
    assert jnp.allclose(loss, ref, rtol=1e-4, atol=1e-4), (loss, ref)

    # Case 2: multi-block grid with a ragged last tile (exercises the masks
    # and the running accumulators).
    B2, C2, D2, T2, Dt2 = 200, 10, 64, 8, 128
    predictions2 = jax.random.normal(keys[4], (B2, C2), dtype=jnp.float32)
    targets2 = jax.random.randint(keys[5], (B2,), 0, C2, dtype=jnp.int32)
    style_features2 = jax.random.normal(keys[6], (B2, D2), dtype=jnp.float32)
    temporal_features2 = jax.random.normal(keys[7], (T2, Dt2), dtype=jnp.float32)

    loss2 = jax.block_until_ready(
        fashion_trend_loss(predictions2, targets2, style_features2,
                           temporal_features2, block_b=128))
    ref2 = _reference_loss(predictions2, targets2, style_features2,
                           temporal_features2)
    assert jnp.allclose(loss2, ref2, rtol=1e-4, atol=1e-4), (loss2, ref2)

    print("KERNEL_OK")
</pallas_src>

<mosaic_0001>
module attributes {stable_mosaic.version = 11 : i64} {
  func.func @_fashion_trend_loss_kernel(%arg0: i32, %arg1: memref<16x8xf32, #tpu.memory_space<vmem>>, %arg2: memref<1x8xi32, #tpu.memory_space<vmem>>, %arg3: memref<8x128xf32, #tpu.memory_space<vmem>>, %arg4: memref<1x128xf32, #tpu.memory_space<vmem>>, %arg5: memref<8x128xf32, #tpu.memory_space<vmem>>, %arg6: memref<1x1xf32, #tpu.memory_space<smem>>, %arg7: memref<1x1xf32, #tpu.memory_space<vmem>>, %arg8: memref<1x1xf32, #tpu.memory_space<vmem>>) attributes {dimension_semantics = [#tpu.dimension_semantics<arbitrary>], iteration_bounds = array<i64: 1>, scalar_prefetch = 0 : i64, scratch_operands = 2 : i64, tpu.core_type = #tpu.core_type<tc>, window_params = [{transform_indices = @transform_0, window_bounds = array<i64: 16, 8>}, {transform_indices = @transform_1, window_bounds = array<i64: 1, 8>}, {transform_indices = @transform_2, window_bounds = array<i64: 8, 128>}, {pipeline_mode = #tpu.pipeline_mode<synchronous>, transform_indices = @transform_3, window_bounds = array<i64: 1, 128>}, {pipeline_mode = #tpu.pipeline_mode<synchronous>, transform_indices = @transform_4, window_bounds = array<i64: 8, 128>}, {transform_indices = @transform_5, window_bounds = array<i64: 1, 1>}]} {
    %c0_i32 = arith.constant 0 : i32
    %0 = arith.cmpi eq, %arg0, %c0_i32 : i32
    %1 = arith.extui %0 : i1 to i32
    %c0_i32_0 = arith.constant 0 : i32
    %2 = arith.cmpi ne, %1, %c0_i32_0 : i32
    scf.if %2 {
      %cst_32 = arith.constant 0.000000e+00 : f32
      %75 = vector.broadcast %cst_32 : f32 to vector<1x1xf32>
      %c0_33 = arith.constant 0 : index
      %c0_34 = arith.constant 0 : index
      %76 = vector.load %arg7[%c0_33, %c0_34] : memref<1x1xf32, #tpu.memory_space<vmem>>, vector<1x1xf32>
      tpu.vector_store %arg7[%c0_33, %c0_34], %75 {strides = array<i32>} : memref<1x1xf32, #tpu.memory_space<vmem>>, vector<1x1xf32>,
      %cst_35 = arith.constant 0.000000e+00 : f32
      %77 = vector.broadcast %cst_35 : f32 to vector<1x1xf32>
      %c0_36 = arith.constant 0 : index
      %c0_37 = arith.constant 0 : index
      %78 = vector.load %arg8[%c0_36, %c0_37] : memref<1x1xf32, #tpu.memory_space<vmem>>, vector<1x1xf32>
      tpu.vector_store %arg8[%c0_36, %c0_37], %77 {strides = array<i32>} : memref<1x1xf32, #tpu.memory_space<vmem>>, vector<1x1xf32>,
    } else {
    }
    %c0 = arith.constant 0 : index
    %c0_1 = arith.constant 0 : index
    %3 = vector.load %arg1[%c0, %c0_1] : memref<16x8xf32, #tpu.memory_space<vmem>>, vector<16x8xf32>
    %cst = arith.constant dense<0xFF800000> : vector<8xf32>
    %4 = vector.multi_reduction <maximumf>, %3, %cst [0] : vector<16x8xf32> to vector<8xf32>
    %5 = vector.shape_cast %4 : vector<8xf32> to vector<1x8xf32>
    %6 = vector.broadcast %5 : vector<1x8xf32> to vector<16x8xf32>
    %7 = arith.subf %3, %6 : vector<16x8xf32>
    %8 = math.exp %7 : vector<16x8xf32>
    %cst_2 = arith.constant dense<0.000000e+00> : vector<8xf32>
    %9 = vector.multi_reduction <add>, %8, %cst_2 [0] : vector<16x8xf32> to vector<8xf32>
    %10 = vector.shape_cast %9 : vector<8xf32> to vector<1x8xf32>
    %11 = math.log %10 : vector<1x8xf32>
    %12 = arith.addf %5, %11 : vector<1x8xf32>
    %13 = tpu.iota {dimensions = array<i32: 0>} : vector<16x8xi32>
    %c0_3 = arith.constant 0 : index
    %c0_4 = arith.constant 0 : index
    %14 = vector.load %arg2[%c0_3, %c0_4] : memref<1x8xi32, #tpu.memory_space<vmem>>, vector<1x8xi32>
    %15 = vector.broadcast %14 : vector<1x8xi32> to vector<16x8xi32>
    %16 = arith.cmpi eq, %13, %15 : vector<16x8xi32>
    %cst_5 = arith.constant 0.000000e+00 : f32
    %17 = vector.broadcast %cst_5 : f32 to vector<16x8xf32>
    %18 = arith.select %16, %3, %17 : vector<16x8xi1>, vector<16x8xf32>
    %cst_6 = arith.constant dense<0.000000e+00> : vector<8xf32>
    %19 = vector.multi_reduction <add>, %18, %cst_6 [0] : vector<16x8xf32> to vector<8xf32>
    %20 = vector.shape_cast %19 : vector<8xf32> to vector<1x8xf32>
    %21 = tpu.iota {dimensions = array<i32: 1>} : vector<1x8xi32>
    %c8_i32 = arith.constant 8 : i32
    %22 = arith.muli %arg0, %c8_i32 : i32
    %23 = vector.broadcast %22 : i32 to vector<1x8xi32>
    %24 = arith.addi %23, %21 : vector<1x8xi32>
    %c8_i32_7 = arith.constant 8 : i32
    %25 = vector.broadcast %c8_i32_7 : i32 to vector<1x8xi32>
    %26 = arith.cmpi slt, %24, %25 : vector<1x8xi32>
    %c0_8 = arith.constant 0 : index
    %c0_9 = arith.constant 0 : index
    %27 = vector.load %arg7[%c0_8, %c0_9] : memref<1x1xf32, #tpu.memory_space<vmem>>, vector<1x1xf32>
    %28 = arith.subf %12, %20 : vector<1x8xf32>
    %cst_10 = arith.constant 0.000000e+00 : f32
    %29 = vector.broadcast %cst_10 : f32 to vector<1x8xf32>
    %30 = arith.select %26, %28, %29 : vector<1x8xi1>, vector<1x8xf32>
    %31 = vector.shape_cast %30 : vector<1x8xf32> to vector<1x1x8xf32>
    %cst_11 = arith.constant dense<0.000000e+00> : vector<1xf32>
    %32 = vector.multi_reduction <add>, %31, %cst_11 [1, 2] : vector<1x1x8xf32> to vector<1xf32>
    %33 = vector.shape_cast %32 : vector<1xf32> to vector<1x1x1xf32>
    %34 = vector.extract %33[0, 0, 0] : f32 from vector<1x1x1xf32>
    %35 = vector.broadcast %34 : f32 to vector<1x1xf32>
    %36 = arith.addf %27, %35 : vector<1x1xf32>
    %c0_12 = arith.constant 0 : index
    %c0_13 = arith.constant 0 : index
    %37 = vector.load %arg7[%c0_12, %c0_13] : memref<1x1xf32, #tpu.memory_space<vmem>>, vector<1x1xf32>
    tpu.vector_store %arg7[%c0_12, %c0_13], %36 {strides = array<i32>} : memref<1x1xf32, #tpu.memory_space<vmem>>, vector<1x1xf32>,
    %c0_14 = arith.constant 0 : index
    %c0_15 = arith.constant 0 : index
    %38 = vector.load %arg3[%c0_14, %c0_15] : memref<8x128xf32, #tpu.memory_space<vmem>>, vector<8x128xf32>
    %c0_16 = arith.constant 0 : index
    %c0_17 = arith.constant 0 : index
    %39 = vector.load %arg4[%c0_16, %c0_17] : memref<1x128xf32, #tpu.memory_space<vmem>>, vector<1x128xf32>
    %40 = vector.broadcast %39 : vector<1x128xf32> to vector<8x128xf32>
    %41 = arith.mulf %38, %40 : vector<8x128xf32>
    %cst_18 = arith.constant dense<0.000000e+00> : vector<8xf32>
    %42 = vector.multi_reduction <add>, %41, %cst_18 [1] : vector<8x128xf32> to vector<8xf32>
    %43 = vector.shape_cast %42 : vector<8xf32> to vector<8x1xf32>
    %44 = arith.mulf %38, %38 : vector<8x128xf32>
    %cst_19 = arith.constant dense<0.000000e+00> : vector<8xf32>
    %45 = vector.multi_reduction <add>, %44, %cst_19 [1] : vector<8x128xf32> to vector<8xf32>
    %46 = vector.shape_cast %45 : vector<8xf32> to vector<8x1xf32>
    %47 = arith.mulf %39, %39 : vector<1x128xf32>
    %cst_20 = arith.constant dense<0.000000e+00> : vector<1xf32>
    %48 = vector.multi_reduction <add>, %47, %cst_20 [1] : vector<1x128xf32> to vector<1xf32>
    %49 = vector.shape_cast %48 : vector<1xf32> to vector<1x1xf32>
    %50 = vector.broadcast %49 : vector<1x1xf32> to vector<8x1xf32>
    %51 = arith.mulf %46, %50 : vector<8x1xf32>
    %cst_21 = arith.constant 1.000000e-16 : f32
    %52 = vector.broadcast %cst_21 : f32 to vector<8x1xf32>
    %53 = arith.maximumf %51, %52 : vector<8x1xf32>
    %54 = math.rsqrt %53 : vector<8x1xf32>
    %55 = arith.mulf %43, %54 : vector<8x1xf32>
    %56 = tpu.iota {dimensions = array<i32: 0>} : vector<8x1xi32>
    %c8_i32_22 = arith.constant 8 : i32
    %57 = arith.muli %arg0, %c8_i32_22 : i32
    %58 = vector.broadcast %57 : i32 to vector<8x1xi32>
    %59 = arith.addi %58, %56 : vector<8x1xi32>
    %c8_i32_23 = arith.constant 8 : i32
    %60 = vector.broadcast %c8_i32_23 : i32 to vector<8x1xi32>
    %61 = arith.cmpi slt, %59, %60 : vector<8x1xi32>
    %c0_24 = arith.constant 0 : index
    %c0_25 = arith.constant 0 : index
    %62 = vector.load %arg8[%c0_24, %c0_25] : memref<1x1xf32, #tpu.memory_space<vmem>>, vector<1x1xf32>
    %cst_26 = arith.constant 0.000000e+00 : f32
    %63 = vector.broadcast %cst_26 : f32 to vector<8x1xf32>
    %64 = arith.select %61, %55, %63 : vector<8x1xi1>, vector<8x1xf32>
    %65 = vector.shape_cast %64 : vector<8x1xf32> to vector<1x8x1xf32>
    %cst_27 = arith.constant dense<0.000000e+00> : vector<1xf32>
    %66 = vector.multi_reduction <add>, %65, %cst_27 [1, 2] : vector<1x8x1xf32> to vector<1xf32>
    %67 = vector.shape_cast %66 : vector<1xf32> to vector<1x1x1xf32>
    %68 = vector.extract %67[0, 0, 0] : f32 from vector<1x1x1xf32>
    %69 = vector.broadcast %68 : f32 to vector<1x1xf32>
    %70 = arith.addf %62, %69 : vector<1x1xf32>
    %c0_28 = arith.constant 0 : index
    %c0_29 = arith.constant 0 : index
    %71 = vector.load %arg8[%c0_28, %c0_29] : memref<1x1xf32, #tpu.memory_space<vmem>>, vector<1x1xf32>
    tpu.vector_store %arg8[%c0_28, %c0_29], %70 {strides = array<i32>} : memref<1x1xf32, #tpu.memory_space<vmem>>, vector<1x1xf32>,
    %c0_i32_30 = arith.constant 0 : i32
    %72 = arith.cmpi eq, %arg0, %c0_i32_30 : i32
    %73 = arith.extui %72 : i1 to i32
    %c0_i32_31 = arith.constant 0 : i32
    %74 = arith.cmpi ne, %73, %c0_i32_31 : i32
    scf.if %74 {
      %c0_32 = arith.constant 0 : index
      %c0_33 = arith.constant 0 : index
      %75 = vector.load %arg5[%c0_32, %c0_33] : memref<8x128xf32, #tpu.memory_space<vmem>>, vector<8x128xf32>
      %c1_i32 = arith.constant 1 : i32
      %76 = tpu.dynamic_rotate %75 by %c1_i32 dim 0 : vector<8x128xf32>, i32 -> vector<8x128xf32>
      %77 = arith.subf %76, %75 : vector<8x128xf32>
      %78 = tpu.iota {dimensions = array<i32: 0>} : vector<8x128xi32>
      %c0_i32_34 = arith.constant 0 : i32
      %79 = vector.broadcast %c0_i32_34 : i32 to vector<8x128xi32>
      %80 = arith.cmpi eq, %78, %79 : vector<8x128xi32>
      %81 = arith.mulf %77, %77 : vector<8x128xf32>
      %cst_35 = arith.constant 0.000000e+00 : f32
      %82 = vector.broadcast %cst_35 : f32 to vector<8x128xf32>
      %83 = arith.select %80, %82, %81 : vector<8x128xi1>, vector<8x128xf32>
      %84 = vector.shape_cast %83 : vector<8x128xf32> to vector<1x8x128xf32>
      %cst_36 = arith.constant dense<0.000000e+00> : vector<1xf32>
      %85 = vector.multi_reduction <add>, %84, %cst_36 [1, 2] : vector<1x8x128xf32> to vector<1xf32>
      %86 = vector.shape_cast %85 : vector<1xf32> to vector<1x1x1xf32>
      %87 = vector.extract %86[0, 0, 0] : f32 from vector<1x1x1xf32>
      %c0_37 = arith.constant 0 : index
      %c0_38 = arith.constant 0 : index
      %88 = vector.load %arg7[%c0_37, %c0_38] : memref<1x1xf32, #tpu.memory_space<vmem>>, vector<1x1xf32>
      %89 = vector.extract %88[0, 0] : f32 from vector<1x1xf32>
      %c0_39 = arith.constant 0 : index
      %c0_40 = arith.constant 0 : index
      %90 = vector.load %arg8[%c0_39, %c0_40] : memref<1x1xf32, #tpu.memory_space<vmem>>, vector<1x1xf32>
      %91 = vector.extract %90[0, 0] : f32 from vector<1x1xf32>
      %cst_41 = arith.constant 3.750000e-02 : f32
      %92 = arith.mulf %cst_41, %89 : f32
      %cst_42 = arith.constant 4.000000e-01 : f32
      %93 = arith.addf %92, %cst_42 : f32
      %cst_43 = arith.constant 5.000000e-02 : f32
      %94 = arith.mulf %cst_43, %91 : f32
      %95 = arith.subf %93, %94 : f32
      %cst_44 = arith.constant 3.34821438E-4 : f32
      %96 = arith.mulf %cst_44, %87 : f32
      %97 = arith.addf %95, %96 : f32
      %c0_45 = arith.constant 0 : index
      %c0_46 = arith.constant 0 : index
      %98 = memref.load %arg6[%c0_45, %c0_46] : memref<1x1xf32, #tpu.memory_space<smem>>
      memref.store %97, %arg6[%c0_45, %c0_46] : memref<1x1xf32, #tpu.memory_space<smem>>
    } else {
    }
    return
  }
  func.func @transform_0(%arg0: i32) -> (i32, i32) {
    %c0_i32 = arith.constant 0 : i32
    %c0_i32_0 = arith.constant 0 : i32
    return %c0_i32, %arg0 : i32, i32
  }
  func.func @transform_1(%arg0: i32) -> (i32, i32) {
    %c0_i32 = arith.constant 0 : i32
    %c0_i32_0 = arith.constant 0 : i32
    return %c0_i32, %arg0 : i32, i32
  }
  func.func @transform_2(%arg0: i32) -> (i32, i32) {
    %c0_i32 = arith.constant 0 : i32
    %c0_i32_0 = arith.constant 0 : i32
    return %arg0, %c0_i32 : i32, i32
  }
  func.func @transform_3(%arg0: i32) -> (i32, i32) {
    %c0_i32 = arith.constant 0 : i32
    %c0_i32_0 = arith.constant 0 : i32
    %c0_i32_1 = arith.constant 0 : i32
    return %c0_i32, %c0_i32_0 : i32, i32
  }
  func.func @transform_4(%arg0: i32) -> (i32, i32) {
    %c0_i32 = arith.constant 0 : i32
    %c0_i32_0 = arith.constant 0 : i32
    %c0_i32_1 = arith.constant 0 : i32
    return %c0_i32, %c0_i32_0 : i32, i32
  }
  func.func @transform_5(%arg0: i32) -> (i32, i32) {
    %c0_i32 = arith.constant 0 : i32
    %c0_i32_0 = arith.constant 0 : i32
    %c0_i32_1 = arith.constant 0 : i32
    return %c0_i32, %c0_i32_0 : i32, i32
  }
}

</mosaic_0001>

<llo_original>
// kernel: tpu_custom_call.1
$region0: #{tpu_custom_call.1}
  #allocation0 [shape = 'u32[]', space=smem, size = 0x4, offset = 0x4, fixed_abs, tag = 'smem constant byte address 0x4 - core index']
  #allocation1 [shape = 'u32[72,128]{1,0:T(1,128)}', space=vmem, size = 0x9000, scoped, tag = 'internal scratch']
  #allocation2 [shape = 'f32[1,1]{1,0:T(1,128)}', space=vmem, size = 0x200, scoped, tag = 'scratch operand']
  #allocation3 [shape = 'f32[1,1]{1,0:T(1,128)}', space=vmem, size = 0x200, scoped, tag = 'scratch operand']
  %s0 = inlined_call_operand.vmem [shape: f32[16,8], index: 0, kind: input, shape index: {}]
  %s1 = inlined_call_operand.vmem [shape: s32[1,8], index: 1, kind: input, shape index: {}]
  %s2 = inlined_call_operand.vmem [shape: f32[8,128], index: 2, kind: input, shape index: {}]
  %s3 = inlined_call_operand.vmem [shape: f32[1,128], index: 3, kind: input, shape index: {}]
  %s4 = inlined_call_operand.vmem [shape: f32[8,128], index: 4, kind: input, shape index: {}]
  %s5 = inlined_call_operand.hbm [shape: f32[1,1], index: 5, kind: output, shape index: {}]
  %s6 = sld [smem:[#allocation0]]
  $region38: #{tpu_custom_call.1} parent=0
    _
  %s8 = ssub.s32 1, %s6
  %s9 = scalar_select 0, %s8, %s6
  $region1: #{tpu_custom_call.1} parent=0
    #allocation4 [shape = 'u8[512]{0}', space=smem, size = 0x200, scoped, tag = 'output window, operand 0, single buffered']
    #allocation5 [shape = 's32[1]{0}', space=sflag, size = 0x4, scoped, tag = 'scoped memory for tpu_custom_call.1']
    %10 = vsyncpa [#allocation5], 0
    // Predicated region
    $region2: #{tpu_custom_call.1} parent=1 // pred_check
      _
    $region3: #{tpu_custom_call.1} parent=1 // pred_check_branch
      %12 = sbr.rel (0) target = $region5
    $region4: #{tpu_custom_call.1} parent=1 // pred_region
      _
    $region5: #{tpu_custom_call.1} parent=1 // pred_fallthru
      _
    // Predicated region
    $region6: #{tpu_custom_call.1} parent=1 // pred_check
      _
    $region7: #{tpu_custom_call.1} parent=1 // pred_check_branch
      %14 = sbr.rel (0) target = $region9
    $region8: #{tpu_custom_call.1} parent=1 // pred_region
      _
    $region9: #{tpu_custom_call.1} parent=1 // pred_fallthru
      _
    // Predicated region
    $region10: #{tpu_custom_call.1} parent=1 // pred_check
      _
    $region11: #{tpu_custom_call.1} parent=1 // pred_check_branch
      %16 = sbr.rel (0) target = $region13
    $region12: #{tpu_custom_call.1} parent=1 // pred_region
      _
    $region13: #{tpu_custom_call.1} parent=1 // pred_fallthru
      _
    // Predicated region
    $region14: #{tpu_custom_call.1} parent=1 // pred_check
      _
    $region15: #{tpu_custom_call.1} parent=1 // pred_check_branch
      %18 = sbr.rel (0) target = $region17
    $region16: #{tpu_custom_call.1} parent=1 // pred_region
      _
    $region17: #{tpu_custom_call.1} parent=1 // pred_fallthru
      _
    // Predicated region
    $region18: #{tpu_custom_call.1} parent=1 // pred_check
      _
    $region19: #{tpu_custom_call.1} parent=1 // pred_check_branch
      %20 = sbr.rel (0) target = $region21
    $region20: #{tpu_custom_call.1} parent=1 // pred_region
      _
    $region21: #{tpu_custom_call.1} parent=1 // pred_fallthru
      _
    %p21 = scmp.eq.s32.totalorder 0, 0
    // Predicated region
    $region22: #{tpu_custom_call.1} parent=1 // pred_check
      %p22 = pneg %p21
    $region23: #{tpu_custom_call.1} parent=1 // pred_check_branch
      %24 = sbr.rel (%p22) target = $region25
    $region24: #{tpu_custom_call.1} parent=1 // pred_region
      %vm25 = vcmask 0
      %26 = vst.msk [vmem:[#allocation2] sm:$0x1] %vm25, 0.0
      %27 = vst.msk [vmem:[#allocation3] sm:$0x1] %vm25, 0.0
    $region25: #{tpu_custom_call.1} parent=1 // pred_fallthru
      _
    %v28 = vld [vmem:[%s0] sm:$0xff]
    %v29 = vld [vmem:[%s0 + $0x8] sm:$0xff]
    %vm30 = vcmask 64512
    %v31 = vsel %vm30, %v28, -inf
    %v32 = vsel %vm30, %v29, -inf
    %v33 = vmax.f32 %v31, %v32
    %v34 = vrot.slane %v33, 4
    %v35 = vmax.f32 %v33, %v34
    %v36 = vrot.slane %v35, 2
    %v37 = vmax.f32 %v35, %v36
    %v38 = vrot.slane %v37, 1
    %v39 = vmax.f32 %v37, %v38
    %v40 = vsub.f32 %v28, %v39
    %v41 = vsub.f32 %v29, %v39
    %v42 = vmul.f32 %v40, 1.442695
    %v43 = vpow.pop %v42
    %v44 = vmul.f32 %v41, 1.442695
    %v45 = vpow.pop %v44
    %v46 = vsel %vm30, %v43, 0.0
    %v47 = vsel %vm30, %v45, 0.0
    %v48 = vadd.f32 %v46, %v47
    %v49 = vrot.slane %v48, 4
    %v50 = vadd.f32 %v48, %v49
    %v51 = vrot.slane %v50, 2
    %v52 = vadd.f32 %v50, %v51
    %v53 = vrot.slane %v52, 1
    %v54 = vadd.f32 %v52, %v53
    %v55 = vlog2.pop %v54
    %v56 = vmul.f32 %v55, 0.6931472
    %v57 = vadd.f32 %v39, %v56
    %v58 = vlaneseq
    %v59 = vshrl.u32 %v58, 7
    %v60 = vadd.s32 %v59, 8
    %v61 = vld [vmem:[%s1] sm:$0x1]
    %v62 = vperm.slane %v61, 0
    %vm63 = vcmp.eq.s32.totalorder %v59, %v62
    %vm64 = vcmp.eq.s32.totalorder %v60, %v62
    %v65 = vsel %vm63, %v28, 0.0
    %v66 = vsel %vm64, %v29, 0.0
    %v67 = vsel %vm30, %v65, 0.0
    %v68 = vsel %vm30, %v66, 0.0
    %v69 = vadd.f32 %v67, %v68
    %v70 = vrot.slane %v69, 4
    %v71 = vadd.f32 %v69, %v70
    %v72 = vrot.slane %v71, 2
    %v73 = vadd.f32 %v71, %v72
    %v74 = vrot.slane %v73, 1
    %v75 = vadd.f32 %v73, %v74
    %v76 = vlaneseq
    %v77 = vand.u32 %v76, 127
    %s78 = smul.u32 0, 8
    %v79 = vstv %s78
    %v80 = vadd.s32 %v79, %v77
    %vm81 = vcmp.lt.s32.totalorder %v80, 8
    %v82 = vld [vmem:[#allocation2] sm:$0x1]
    %v83 = vsub.f32 %v57, %v75
    %v84 = vsel %vm81, %v83, 0.0
    %vm85 = vcmask 57344
    %v86 = vsel %vm85, %v84, 0.0
    %87 = vadd.xlane.f32.xlu0 %v86
    %v88 = vpop.xlane.xlu0 %87
    %v89 = vrot.slane %v88, 4
    %v90 = vadd.f32 %v88, %v89
    %v91 = vrot.slane %v90, 2
    %v92 = vadd.f32 %v90, %v91
    %v93 = vrot.slane %v92, 1
    %v94 = vadd.f32 %v92, %v93
    %s95 = vtos %v94
    %v96 = vstv %s95
    %v97 = vadd.f32 %v82, %v96
    %vm98 = vcmask 0
    %99 = vst.msk [vmem:[#allocation2] sm:$0x1] %vm98, %v97
    %v100 = vld [vmem:[%s2] sm:$0xff]
    %v101 = vld [vmem:[%s3] sm:$0x1]
    %v103 = vperm.slane %v101, 0
    %v105 = vmul.f32 %v100, %v103
    %106 = vadd.xlane.f32.xlu0 %v105
    %v107 = vpop.xlane.xlu0 %106
    %v108 = vmul.f32 %v100, %v100
    %109 = vadd.xlane.f32.xlu0 %v108
    %v110 = vpop.xlane.xlu0 %109
    %v111 = vmul.f32 %v101, %v101
    %vm112 = vcmask 1040384
    %v113 = vsel %vm112, %v111, 0.0
    %114 = vadd.xlane.f32.xlu0 %v113
    %v115 = vpop.xlane.xlu0 %114
    %v116 = vperm.slane %v115, 0
    %v117 = vmul.f32 %v110, %v116
    %v118 = vmax.f32 %v117, 1e-16
    %v119 = vrsqrt.pop %v118
    %v120 = vmul.f32 %v119, %v118
    %v121 = vmul.f32 %v120, %v119
    %v122 = vmul.f32 0.5, %v121
    %v123 = vsub.f32 1.5, %v122
    %v124 = vmul.f32 %v119, %v123
    %vm125 = vweird.f32 %v118
    %vm126 = vweird.f32 %v119
    %vm127 = vmor %vm125, %vm126
    %v128 = vsel %vm127, %v119, %v124
    %v129 = vmul.f32 %v107, %v128
    %v130 = vadd.s32 %v79, %v59
    %vm131 = vcmp.lt.s32.totalorder %v130, 8
    %v132 = vld [vmem:[#allocation3] sm:$0x1]
    %v133 = vsel %vm131, %v129, 0.0
    %vm134 = vcmask 7168
    %v135 = vsel %vm134, %v133, 0.0
    %136 = vadd.xlane.f32.xlu0 %v135
    %v137 = vpop.xlane.xlu0 %136
    %v138 = vrot.slane %v137, 4
    %v139 = vadd.f32 %v137, %v138
    %v140 = vrot.slane %v139, 2
    %v141 = vadd.f32 %v139, %v140
    %v142 = vrot.slane %v141, 1
    %v143 = vadd.f32 %v141, %v142
    %s144 = vtos %v143
    %v145 = vstv %s144
    %v146 = vadd.f32 %v132, %v145
    %147 = vst.msk [vmem:[#allocation3] sm:$0x1] %vm98, %v146
    // Predicated region
    $region26: #{tpu_custom_call.1} parent=1 // pred_check
      %p148 = pneg %p21
    $region27: #{tpu_custom_call.1} parent=1 // pred_check_branch
      %150 = sbr.rel (%p148) target = $region29
    $region28: #{tpu_custom_call.1} parent=1 // pred_region
      %v151 = vld [vmem:[%s4] sm:$0xff]
      %v152 = vrot.slane %v151, 7
      %v153 = vsub.f32 %v152, %v151
      %vm154 = vcmp.eq.s32.totalorder %v59, 0
      %v155 = vmul.f32 %v153, %v153
      %v156 = vsel %vm154, 0.0, %v155
      %157 = vadd.xlane.f32.xlu0 %v156
      %v158 = vpop.xlane.xlu0 %157
      %v159 = vrot.slane %v158, 4
      %v160 = vadd.f32 %v158, %v159
      %v161 = vrot.slane %v160, 2
      %v162 = vadd.f32 %v160, %v161
      %v163 = vrot.slane %v162, 1
      %v164 = vadd.f32 %v162, %v163
      %s165 = vtos %v164
      %v166 = vld [vmem:[#allocation2] sm:$0x1]
      %s167 = vtos %v166
      %v168 = vld [vmem:[#allocation3] sm:$0x1]
      %s169 = vtos %v168
      %s170 = smul.f32 %s167, 0.0375
      %s171 = sadd.f32 %s170, 0.4
      %s172 = smul.f32 %s169, 0.05
      %s173 = ssub.f32 %s171, %s172
      %s174 = smul.f32 %s165, 0.00033482144
      %s175 = sadd.f32 %s173, %s174
      %s176 = scalar_lea.smem [#allocation4], 0
      %177 = sst [smem:[%s176]] %s175
    $region29: #{tpu_custom_call.1} parent=1 // pred_fallthru
      _
    // Predicated region
    $region30: #{tpu_custom_call.1} parent=1 // pred_check
      _
    $region31: #{tpu_custom_call.1} parent=1 // pred_check_branch
      %179 = sbr.rel (0) target = $region33
    $region32: #{tpu_custom_call.1} parent=1 // pred_region
      %181 = vsyncadd [#allocation5], 0
      %s183 = sshll.u32 %s5, 4
      %s184 = int_to_ptr.hbm [resolvable:$true] %s183
      %186 = dma.smem_to_hbm [#allocation4], 16, %s184, [#allocation5]
    $region33: #{tpu_custom_call.1} parent=1 // pred_fallthru
      _
    // Predicated region
    $region34: #{tpu_custom_call.1} parent=1 // pred_check
      _
    $region35: #{tpu_custom_call.1} parent=1 // pred_check_branch
      %188 = sbr.rel (0) target = $region37
    $region36: #{tpu_custom_call.1} parent=1 // pred_region
      %190 = dma.done [#allocation5], 16
    $region37: #{tpu_custom_call.1} parent=1 // pred_fallthru
      _
    %191 = sfence
    %192 = vsyncpa [#allocation5], 1

</llo_original>
